<compile_context>
chip_gen: v7x
topology: tpu7x:2x2x1
jax: 0.10.0
libtpu: 0.0.40
codegen_flags: <defaults>
</compile_context>

<pallas_src>
import jax
import jax.numpy as jnp
from jax.experimental import pallas as pl
from jax.experimental.pallas import tpu as pltpu


def _pick_batch_block(n, l, *, target_lane_rows=4096, max_unroll=8):
    """Samples per grid step.

    Constraints (perf review):
      * nb divides N            -> no batch padding / masking, no wrapper copies
      * >= 2 grid steps if N>1  -> both v7x TensorCores + DMA/compute overlap
      * nb * L ~ target         -> amortize the ~0.35us per-step overhead
      * nb <= max_unroll        -> bound the per-sample static unroll
    """
    cap = max(1, min(n, target_lane_rows // max(l, 1), max_unroll))
    if n > 1:
        cap = min(cap, (n + 1) // 2)      # keep ceil(N/nb) >= 2
    best = 1
    for d in range(1, cap + 1):
        if n % d == 0:
            best = d
    return best


def _make_kernel(stride, padding, ksize, l_in, l_out):
    """Kernel closed over static conv geometry.  All refs are NCL-shaped."""
    # Right zero-pad so every tap slice is in-bounds (left pad = `padding`).
    pad_right = max(0, ksize + (l_out - 1) * stride - padding - l_in)

    def kernel(x_ref, w1_ref, b1_ref, wd_ref, b2_ref, w3_ref, b3_ref, out_ref):
        nb = x_ref.shape[0]
        cexp = w1_ref.shape[0]
        w1 = w1_ref[...]          # (Cexp, Cin)   BN0-folded
        b1 = b1_ref[...]          # (Cexp, 1)
        wd = wd_ref[...]          # (Cexp, K)     BN1-folded
        b2 = b2_ref[...]          # (Cexp, 1)
        w3 = w3_ref[...]          # (Cout, Cexp)
        b3 = b3_ref[...]          # (Cout, 1)

        for n in range(nb):       # static unroll, nb <= max_unroll
            x_n = x_ref[n]        # (Cin, L): L on lanes, channels on sublanes

            # ---- conv1 (1x1, BN0 folded) + ReLU :: MXU --------------------
            y = jnp.dot(w1, x_n, preferred_element_type=jnp.float32)
            y = jnp.maximum(y + b1, 0.0)                     # (Cexp, L)

            # ---- depthwise conv (K taps, BN1 folded) + ReLU ---------------
            # Explicit zero-pad along L, then one slice per tap evaluated
            # only at the output columns (handles stride > 1 with no extra
            # work and no boundary masks).
            parts = []
            if padding > 0:
                parts.append(jnp.zeros((cexp, padding), jnp.float32))
            parts.append(y)
            if pad_right > 0:
                parts.append(jnp.zeros((cexp, pad_right), jnp.float32))
            y_pad = jnp.concatenate(parts, axis=1) if len(parts) > 1 else y

            acc = None
            for k in range(ksize):
                limit = k + (l_out - 1) * stride + 1
                # TODO(synk): if a target rejects lane-strided slices, fall
                # back to a phase-select reshape for the stride>1 case.
                tap = jax.lax.slice(y_pad, (0, k), (cexp, limit), (1, stride))
                term = tap * wd[:, k:k + 1]                  # (Cexp, l_out)
                acc = term if acc is None else acc + term
            y2 = jnp.maximum(acc + b2, 0.0)                  # (Cexp, l_out)

            # ---- conv3 (1x1) + dropout(eval)=identity (+ residual) --------
            y3 = jnp.dot(w3, y2, preferred_element_type=jnp.float32) + b3
            if stride == 1:
                y3 = y3 + x_n                                # Cin == Cout, L == l_out
            out_ref[n] = y3.astype(out_ref.dtype)

    return kernel


def bottleneck_forward(x_ncl, raw_params, *, stride=1, padding=1, eps=1e-5):
    """x_ncl: (N, Cin, L) float32 (PyTorch Conv1d layout). Returns (N, Cout, L_out).

    raw_params: PyTorch-shaped parameters
      (w1 (Cexp,Cin,1), b1 (Cexp,), wd (Cexp,1,K), bd (Cexp,),
       w3 (Cout,Cexp,1), b3 (Cout,),
       g0, be0, rm0, rv0, g1, be1, rm1, rv1)   # BN1d weights + running stats
    """
    (w1, b1, wd, bd, w3, b3,
     g0, be0, rm0, rv0, g1, be1, rm1, rv1) = raw_params

    N, Cin, L = x_ncl.shape
    Cexp = int(w1.shape[0])
    Cout = int(w3.shape[0])
    K = int(wd.shape[2])

    l_out = (L + 2 * padding - K) // stride + 1
    assert l_out >= 1
    if stride == 1:
        assert Cin == Cout and l_out == L, (
            "residual path requires matching shapes (as in the PyTorch module)")

    # ---- fold eval-mode BatchNorm into the adjacent convs -------------------
    f32 = jnp.float32
    s0 = g0 / jnp.sqrt(rv0 + eps)
    t0 = be0 - rm0 * s0
    s1 = g1 / jnp.sqrt(rv1 + eps)
    t1 = be1 - rm1 * s1

    w1f = (w1[:, :, 0] * s0[:, None]).astype(f32)        # (Cexp, Cin)
    b1f = (b1 * s0 + t0).reshape(Cexp, 1).astype(f32)    # (Cexp, 1)
    wdf = (wd[:, 0, :] * s1[:, None]).astype(f32)        # (Cexp, K)
    bdf = (bd * s1 + t1).reshape(Cexp, 1).astype(f32)    # (Cexp, 1)
    w3f = w3[:, :, 0].astype(f32)                        # (Cout, Cexp)
    b3f = b3.reshape(Cout, 1).astype(f32)                # (Cout, 1)

    # ---- batch blocking: nb | N, >= 2 grid steps when N > 1 -----------------
    nb = _pick_batch_block(N, L)
    grid_n = N // nb

    params = (w1f, b1f, wdf, bdf, w3f, b3f)
    param_specs = [pl.BlockSpec(p.shape, lambda i, nd=p.ndim: (0,) * nd)
                   for p in params]

    kernel = _make_kernel(stride, padding, K, L, l_out)

    flops_per_sample = (2 * Cexp * Cin * L            # conv1
                        + 2 * Cexp * K * l_out        # depthwise
                        + 2 * Cout * Cexp * l_out)    # conv3
    cost = pl.CostEstimate(
        flops=int(N * flops_per_sample),
        transcendentals=0,
        bytes_accessed=int(4 * (N * Cin * L + N * Cout * l_out
                                + grid_n * sum(int(p.size) for p in params))))

    x = x_ncl if x_ncl.dtype == f32 else x_ncl.astype(f32)

    out = pl.pallas_call(
        kernel,
        out_shape=jax.ShapeDtypeStruct((N, Cout, l_out), f32),
        grid=(grid_n,),
        in_specs=[pl.BlockSpec((nb, Cin, L), lambda i: (i, 0, 0))] + param_specs,
        out_specs=pl.BlockSpec((nb, Cout, l_out), lambda i: (i, 0, 0)),
        compiler_params=pltpu.CompilerParams(
            dimension_semantics=("parallel",)),
        cost_estimate=cost,
    )(x, *params)
    return out


# ---------------------------------------------------------------------------
# Pure-JAX (lax.conv) reference in PyTorch NCL layout, for correctness check.
# ---------------------------------------------------------------------------
def reference_forward(x_ncl, raw, *, stride=1, padding=1, eps=1e-5):
    (w1, b1, wd, bd, w3, b3,
     g0, be0, rm0, rv0, g1, be1, rm1, rv1) = raw
    dn = ('NCH', 'OIH', 'NCH')

    def bn(y, g, be, rm, rv):
        return ((y - rm[None, :, None]) / jnp.sqrt(rv[None, :, None] + eps)
                * g[None, :, None] + be[None, :, None])

    y = jax.lax.conv_general_dilated(x_ncl, w1, (1,), 'VALID',
                                     dimension_numbers=dn) + b1[None, :, None]
    y = jnp.maximum(bn(y, g0, be0, rm0, rv0), 0.0)
    y = jax.lax.conv_general_dilated(y, wd, (stride,), [(padding, padding)],
                                     dimension_numbers=dn,
                                     feature_group_count=wd.shape[0]) + bd[None, :, None]
    y = jnp.maximum(bn(y, g1, be1, rm1, rv1), 0.0)
    y = jax.lax.conv_general_dilated(y, w3, (1,), 'VALID',
                                     dimension_numbers=dn) + b3[None, :, None]
    if stride == 1:
        y = y + x_ncl
    return y


if __name__ == "__main__":
    def make_case(key, N, Cin, Cout, expansion, K, L):
        Cexp = Cin * expansion
        ks = jax.random.split(key, 15)
        w1 = 0.2 * jax.random.normal(ks[0], (Cexp, Cin, 1), jnp.float32)
        b1 = 0.1 * jax.random.normal(ks[1], (Cexp,), jnp.float32)
        wd = 0.2 * jax.random.normal(ks[2], (Cexp, 1, K), jnp.float32)
        bd = 0.1 * jax.random.normal(ks[3], (Cexp,), jnp.float32)
        w3 = 0.2 * jax.random.normal(ks[4], (Cout, Cexp, 1), jnp.float32)
        b3 = 0.1 * jax.random.normal(ks[5], (Cout,), jnp.float32)
        g0 = 1.0 + 0.1 * jax.random.normal(ks[6], (Cexp,), jnp.float32)
        be0 = 0.1 * jax.random.normal(ks[7], (Cexp,), jnp.float32)
        rm0 = 0.1 * jax.random.normal(ks[8], (Cexp,), jnp.float32)
        rv0 = 0.5 + jnp.abs(jax.random.normal(ks[9], (Cexp,), jnp.float32))
        g1 = 1.0 + 0.1 * jax.random.normal(ks[10], (Cexp,), jnp.float32)
        be1 = 0.1 * jax.random.normal(ks[11], (Cexp,), jnp.float32)
        rm1 = 0.1 * jax.random.normal(ks[12], (Cexp,), jnp.float32)
        rv1 = 0.5 + jnp.abs(jax.random.normal(ks[13], (Cexp,), jnp.float32))
        x = jax.random.normal(ks[14], (N, Cin, L), jnp.float32)
        raw = (w1, b1, wd, bd, w3, b3, g0, be0, rm0, rv0, g1, be1, rm1, rv1)
        return x, raw

    key = jax.random.PRNGKey(0)
    k1, k2 = jax.random.split(key)

    # Case 1: Bottleneck(4, 4, expansion=4, ReLU, stride=1, padding=1) -> residual path.
    x1, raw1 = make_case(k1, N=2, Cin=4, Cout=4, expansion=4, K=3, L=16)
    out1 = jax.block_until_ready(bottleneck_forward(x1, raw1, stride=1, padding=1))
    ref1 = jax.block_until_ready(reference_forward(x1, raw1, stride=1, padding=1))
    assert out1.shape == ref1.shape, (out1.shape, ref1.shape)
    assert jnp.allclose(out1, ref1, atol=2e-2, rtol=2e-2), \
        float(jnp.max(jnp.abs(out1 - ref1)))

    # Case 2: Bottleneck(4, 8, expansion=4, ReLU, stride=2, padding=1) -> no residual.
    x2, raw2 = make_case(k2, N=3, Cin=4, Cout=8, expansion=4, K=3, L=16)
    out2 = jax.block_until_ready(bottleneck_forward(x2, raw2, stride=2, padding=1))
    ref2 = jax.block_until_ready(reference_forward(x2, raw2, stride=2, padding=1))
    assert out2.shape == ref2.shape, (out2.shape, ref2.shape)
    assert jnp.allclose(out2, ref2, atol=2e-2, rtol=2e-2), \
        float(jnp.max(jnp.abs(out2 - ref2)))

    print("KERNEL_OK")
</pallas_src>

<mosaic_0001>
module attributes {stable_mosaic.version = 11 : i64} {
  func.func @kernel(%arg0: i32, %arg1: memref<1x4x16xf32, #tpu.memory_space<vmem>>, %arg2: memref<16x4xf32, #tpu.memory_space<vmem>>, %arg3: memref<16x1xf32, #tpu.memory_space<vmem>>, %arg4: memref<16x3xf32, #tpu.memory_space<vmem>>, %arg5: memref<16x1xf32, #tpu.memory_space<vmem>>, %arg6: memref<4x16xf32, #tpu.memory_space<vmem>>, %arg7: memref<4x1xf32, #tpu.memory_space<vmem>>, %arg8: memref<1x4x16xf32, #tpu.memory_space<vmem>>) attributes {dimension_semantics = [#tpu.dimension_semantics<parallel>], iteration_bounds = array<i64: 2>, scalar_prefetch = 0 : i64, scratch_operands = 0 : i64, tpu.core_type = #tpu.core_type<tc>, window_params = [{transform_indices = @transform_0, window_bounds = array<i64: 1, 4, 16>}, {pipeline_mode = #tpu.pipeline_mode<synchronous>, transform_indices = @transform_1, window_bounds = array<i64: 16, 4>}, {pipeline_mode = #tpu.pipeline_mode<synchronous>, transform_indices = @transform_2, window_bounds = array<i64: 16, 1>}, {pipeline_mode = #tpu.pipeline_mode<synchronous>, transform_indices = @transform_3, window_bounds = array<i64: 16, 3>}, {pipeline_mode = #tpu.pipeline_mode<synchronous>, transform_indices = @transform_4, window_bounds = array<i64: 16, 1>}, {pipeline_mode = #tpu.pipeline_mode<synchronous>, transform_indices = @transform_5, window_bounds = array<i64: 4, 16>}, {pipeline_mode = #tpu.pipeline_mode<synchronous>, transform_indices = @transform_6, window_bounds = array<i64: 4, 1>}, {transform_indices = @transform_7, window_bounds = array<i64: 1, 4, 16>}]} {
    %c0 = arith.constant 0 : index
    %c0_0 = arith.constant 0 : index
    %0 = vector.load %arg2[%c0, %c0_0] : memref<16x4xf32, #tpu.memory_space<vmem>>, vector<16x4xf32>
    %c0_1 = arith.constant 0 : index
    %c0_2 = arith.constant 0 : index
    %1 = vector.load %arg3[%c0_1, %c0_2] : memref<16x1xf32, #tpu.memory_space<vmem>>, vector<16x1xf32>
    %c0_3 = arith.constant 0 : index
    %c0_4 = arith.constant 0 : index
    %2 = vector.load %arg4[%c0_3, %c0_4] : memref<16x3xf32, #tpu.memory_space<vmem>>, vector<16x3xf32>
    %c0_5 = arith.constant 0 : index
    %c0_6 = arith.constant 0 : index
    %3 = vector.load %arg5[%c0_5, %c0_6] : memref<16x1xf32, #tpu.memory_space<vmem>>, vector<16x1xf32>
    %c0_7 = arith.constant 0 : index
    %c0_8 = arith.constant 0 : index
    %4 = vector.load %arg6[%c0_7, %c0_8] : memref<4x16xf32, #tpu.memory_space<vmem>>, vector<4x16xf32>
    %c0_9 = arith.constant 0 : index
    %c0_10 = arith.constant 0 : index
    %5 = vector.load %arg7[%c0_9, %c0_10] : memref<4x1xf32, #tpu.memory_space<vmem>>, vector<4x1xf32>
    %c0_11 = arith.constant 0 : index
    %c0_12 = arith.constant 0 : index
    %c0_13 = arith.constant 0 : index
    %6 = vector.load %arg1[%c0_11, %c0_12, %c0_13] : memref<1x4x16xf32, #tpu.memory_space<vmem>>, vector<1x4x16xf32>
    %7 = vector.shape_cast %6 : vector<1x4x16xf32> to vector<4x16xf32>
    %cst = arith.constant dense<0.000000e+00> : vector<16x16xf32>
    %8 = tpu.matmul %0, %7, %cst {dimension_numbers = #tpu.dot_dimension_numbers<[1], [0], [0], [1], [0, 0, 1, 1], [], []>} : vector<16x4xf32>, vector<4x16xf32>, vector<16x16xf32> -> vector<16x16xf32>
    %9 = vector.broadcast %1 : vector<16x1xf32> to vector<16x16xf32>
    %10 = arith.addf %8, %9 : vector<16x16xf32>
    %cst_14 = arith.constant 0.000000e+00 : f32
    %11 = vector.broadcast %cst_14 : f32 to vector<16x16xf32>
    %12 = arith.maximumf %10, %11 : vector<16x16xf32>
    %cst_15 = arith.constant 0.000000e+00 : f32
    %13 = vector.broadcast %cst_15 : f32 to vector<16x1xf32>
    %cst_16 = arith.constant 0.000000e+00 : f32
    %14 = vector.broadcast %cst_16 : f32 to vector<16x1xf32>
    %15 = tpu.concatenate %13, %12, %14 in 1 : vector<16x1xf32>, vector<16x16xf32>, vector<16x1xf32> -> vector<16x18xf32>
    %16 = vector.extract_strided_slice %15 {offsets = [0, 0], sizes = [16, 16], strides = [1, 1]} : vector<16x18xf32> to vector<16x16xf32>
    %17 = vector.extract_strided_slice %2 {offsets = [0, 0], sizes = [16, 1], strides = [1, 1]} : vector<16x3xf32> to vector<16x1xf32>
    %18 = vector.broadcast %17 : vector<16x1xf32> to vector<16x16xf32>
    %19 = arith.mulf %16, %18 : vector<16x16xf32>
    %20 = vector.extract_strided_slice %15 {offsets = [0, 1], sizes = [16, 16], strides = [1, 1]} : vector<16x18xf32> to vector<16x16xf32>
    %21 = vector.extract_strided_slice %2 {offsets = [0, 1], sizes = [16, 1], strides = [1, 1]} : vector<16x3xf32> to vector<16x1xf32>
    %22 = vector.broadcast %21 : vector<16x1xf32> to vector<16x16xf32>
    %23 = arith.mulf %20, %22 : vector<16x16xf32>
    %24 = arith.addf %19, %23 : vector<16x16xf32>
    %25 = vector.extract_strided_slice %15 {offsets = [0, 2], sizes = [16, 16], strides = [1, 1]} : vector<16x18xf32> to vector<16x16xf32>
    %26 = vector.extract_strided_slice %2 {offsets = [0, 2], sizes = [16, 1], strides = [1, 1]} : vector<16x3xf32> to vector<16x1xf32>
    %27 = vector.broadcast %26 : vector<16x1xf32> to vector<16x16xf32>
    %28 = arith.mulf %25, %27 : vector<16x16xf32>
    %29 = arith.addf %24, %28 : vector<16x16xf32>
    %30 = vector.broadcast %3 : vector<16x1xf32> to vector<16x16xf32>
    %31 = arith.addf %29, %30 : vector<16x16xf32>
    %cst_17 = arith.constant 0.000000e+00 : f32
    %32 = vector.broadcast %cst_17 : f32 to vector<16x16xf32>
    %33 = arith.maximumf %31, %32 : vector<16x16xf32>
    %cst_18 = arith.constant dense<0.000000e+00> : vector<4x16xf32>
    %34 = tpu.matmul %4, %33, %cst_18 {dimension_numbers = #tpu.dot_dimension_numbers<[1], [0], [0], [1], [0, 0, 1, 1], [], []>} : vector<4x16xf32>, vector<16x16xf32>, vector<4x16xf32> -> vector<4x16xf32>
    %35 = vector.broadcast %5 : vector<4x1xf32> to vector<4x16xf32>
    %36 = arith.addf %34, %35 : vector<4x16xf32>
    %37 = arith.addf %36, %7 : vector<4x16xf32>
    %c0_19 = arith.constant 0 : index
    %c0_20 = arith.constant 0 : index
    %c0_21 = arith.constant 0 : index
    %38 = vector.load %arg8[%c0_19, %c0_20, %c0_21] : memref<1x4x16xf32, #tpu.memory_space<vmem>>, vector<1x4x16xf32>
    %39 = vector.shape_cast %38 : vector<1x4x16xf32> to vector<4x16xf32>
    %40 = vector.shape_cast %37 : vector<4x16xf32> to vector<1x4x16xf32>
    tpu.vector_store %arg8[%c0_19, %c0_20, %c0_21], %40 {strides = array<i32>} : memref<1x4x16xf32, #tpu.memory_space<vmem>>, vector<1x4x16xf32>,
    return
  }
  func.func @transform_0(%arg0: i32) -> (i32, i32, i32) {
    %c0_i32 = arith.constant 0 : i32
    %c0_i32_0 = arith.constant 0 : i32
    %c0_i32_1 = arith.constant 0 : i32
    return %arg0, %c0_i32, %c0_i32_0 : i32, i32, i32
  }
  func.func @transform_1(%arg0: i32) -> (i32, i32) {
    %c0_i32 = arith.constant 0 : i32
    %c0_i32_0 = arith.constant 0 : i32
    %c0_i32_1 = arith.constant 0 : i32
    return %c0_i32, %c0_i32_0 : i32, i32
  }
  func.func @transform_2(%arg0: i32) -> (i32, i32) {
    %c0_i32 = arith.constant 0 : i32
    %c0_i32_0 = arith.constant 0 : i32
    %c0_i32_1 = arith.constant 0 : i32
    return %c0_i32, %c0_i32_0 : i32, i32
  }
  func.func @transform_3(%arg0: i32) -> (i32, i32) {
    %c0_i32 = arith.constant 0 : i32
    %c0_i32_0 = arith.constant 0 : i32
    %c0_i32_1 = arith.constant 0 : i32
    return %c0_i32, %c0_i32_0 : i32, i32
  }
  func.func @transform_4(%arg0: i32) -> (i32, i32) {
    %c0_i32 = arith.constant 0 : i32
    %c0_i32_0 = arith.constant 0 : i32
    %c0_i32_1 = arith.constant 0 : i32
    return %c0_i32, %c0_i32_0 : i32, i32
  }
  func.func @transform_5(%arg0: i32) -> (i32, i32) {
    %c0_i32 = arith.constant 0 : i32
    %c0_i32_0 = arith.constant 0 : i32
    %c0_i32_1 = arith.constant 0 : i32
    return %c0_i32, %c0_i32_0 : i32, i32
  }
  func.func @transform_6(%arg0: i32) -> (i32, i32) {
    %c0_i32 = arith.constant 0 : i32
    %c0_i32_0 = arith.constant 0 : i32
    %c0_i32_1 = arith.constant 0 : i32
    return %c0_i32, %c0_i32_0 : i32, i32
  }
  func.func @transform_7(%arg0: i32) -> (i32, i32, i32) {
    %c0_i32 = arith.constant 0 : i32
    %c0_i32_0 = arith.constant 0 : i32
    %c0_i32_1 = arith.constant 0 : i32
    return %arg0, %c0_i32, %c0_i32_0 : i32, i32, i32
  }
}

</mosaic_0001>

<llo_original>
// kernel: tpu_custom_call.1
$region0: #{tpu_custom_call.1}
  #allocation0 [shape = 'u32[]', space=smem, size = 0x4, offset = 0x4, fixed_abs, tag = 'smem constant byte address 0x4 - core index']
  #allocation1 [shape = 'u32[144,128]{1,0:T(1,128)}', space=vmem, size = 0x12000, scoped, tag = 'internal scratch']
  %s0 = inlined_call_operand.vmem [shape: f32[2,4,16], index: 0, kind: input, shape index: {}]
  %s1 = inlined_call_operand.vmem [shape: f32[16,4], index: 1, kind: input, shape index: {}]
  %s2 = inlined_call_operand.vmem [shape: f32[16,1], index: 2, kind: input, shape index: {}]
  %s3 = inlined_call_operand.vmem [shape: f32[16,3], index: 3, kind: input, shape index: {}]
  %s4 = inlined_call_operand.vmem [shape: f32[16,1], index: 4, kind: input, shape index: {}]
  %s5 = inlined_call_operand.vmem [shape: f32[4,16], index: 5, kind: input, shape index: {}]
  %s6 = inlined_call_operand.vmem [shape: f32[4,1], index: 6, kind: input, shape index: {}]
  %s7 = inlined_call_operand.hbm [shape: f32[2,4,16], index: 7, kind: output, shape index: {}]
  %s8 = sld [smem:[#allocation0]]
  $region61: #{tpu_custom_call.1} parent=0
    _
  %s10 = ssub.s32 1, %s8
  %s11 = scalar_select 0, %s10, %s8
  $region1: #{tpu_custom_call.1} parent=0
    #allocation2 [shape = 'u8[4096]{0}', space=vmem, size = 0x1000, scoped, tag = 'output window, operand 0']
    #allocation3 [shape = 's32[2]{0}', space=sflag, size = 0x8, scoped, tag = 'scoped memory for tpu_custom_call.1']
    %12 = vsyncpa [#allocation3], 0
    %s13 = scalar_lea.sflag [#allocation3], 1
    %14 = vsyncpa %s13, 0
    loop: start=0, step=1, limit=4
    $region2: #{tpu_custom_call.1} parent=1 // loop_pre_header
      _
    $region3: #{tpu_custom_call.1} parent=1 // loop_header
      %s16 = sphi 0, %s20
      %p17 = scmp.ge.s32.totalorder %s16, 4
      %s26 = sphi 0, %s28
      %s29 = sphi 0, %s26
      %s30 = sphi 0, %s29
      %s46 = sphi 0, %s30
      %s50 = sphi 0, %s50
      %s52 = sphi 0, %s50
      %s53 = sphi 0, %s52
      %s67 = sphi 0, %s53
      %s71 = sphi 0, %s71
      %s73 = sphi 0, %s71
      %s74 = sphi 0, %s73
      %s88 = sphi 0, %s74
      %s92 = sphi 0, %s92
      %s94 = sphi 0, %s92
      %s95 = sphi 0, %s94
      %s109 = sphi 0, %s95
      %s113 = sphi 0, %s113
      %s115 = sphi 0, %s113
      %s116 = sphi 0, %s115
      %s130 = sphi 0, %s116
      %s134 = sphi 0, %s134
      %s136 = sphi 0, %s134
      %s137 = sphi 0, %s136
      %s151 = sphi 0, %s137
      %s155 = sphi 0, %s155
      %s157 = sphi 0, %s155
      %s158 = sphi 0, %s157
      %s172 = sphi 0, %s158
      %s178 = sphi 0, %s180
      %s181 = sphi 0, %s178
      %s182 = sphi 0, %s181
      %s198 = sphi 0, %s182
    $region4: #{tpu_custom_call.1} parent=1 // loop_header_branch
      %19 = sbr.rel (%p17) target = $region8
    $region5: #{tpu_custom_call.1} parent=1 // loop_body
      %s21 = ssub.s32 %s16, 1
      %s22 = ssub.s32 %s16, 2
      %s23 = sadd.s32 %s16, 1
      %s24 = ssub.s32 %s16, %s23
      %p25 = scmp.eq.s32.totalorder %s24, 0
      %s27 = sadd.s32 %s26, 1
      %s28 = scalar_select %p25, %s26, %s27
      %p31 = pneg %p25
      %p32 = scmp.eq.s32.totalorder %s16, 1
      %p33 = por %p31, %p32
      %p34 = scmp.ne.s32.totalorder %s26, %s29
      %p35 = scmp.eq.s32.totalorder %s16, 0
      %p36 = por %p34, %p35
      %p37 = scmp.ne.s32.totalorder %s26, %s29
      %p38 = scmp.eq.s32.totalorder %s21, 1
      %p39 = por %p37, %p38
      %p40 = scmp.ne.s32.totalorder %s29, %s30
      %p41 = scmp.eq.s32.totalorder %s21, 0
      %p42 = por %p40, %p41
      %p43 = scmp.ne.s32.totalorder %s29, %s30
      %p44 = scmp.eq.s32.totalorder %s22, 1
      %p45 = por %p43, %p44
      %p47 = scmp.ne.s32.totalorder %s30, %s46
      %p48 = scmp.eq.s32.totalorder %s22, 0
      %p49 = por %p47, %p48
      %s51 = sadd.s32 %s50, 1
      %p54 = scmp.eq.s32.totalorder %s16, 1
      %p55 = scmp.ne.s32.totalorder %s50, %s52
      %p56 = scmp.eq.s32.totalorder %s16, 0
      %p57 = por %p55, %p56
      %p58 = scmp.ne.s32.totalorder %s50, %s52
      %p59 = scmp.eq.s32.totalorder %s21, 1
      %p60 = por %p58, %p59
      %p61 = scmp.ne.s32.totalorder %s52, %s53
      %p62 = scmp.eq.s32.totalorder %s21, 0
      %p63 = por %p61, %p62
      %p64 = scmp.ne.s32.totalorder %s52, %s53
      %p65 = scmp.eq.s32.totalorder %s22, 1
      %p66 = por %p64, %p65
      %p68 = scmp.ne.s32.totalorder %s53, %s67
      %p69 = scmp.eq.s32.totalorder %s22, 0
      %p70 = por %p68, %p69
      %s72 = sadd.s32 %s71, 1
      %p75 = scmp.eq.s32.totalorder %s16, 1
      %p76 = scmp.ne.s32.totalorder %s71, %s73
      %p77 = scmp.eq.s32.totalorder %s16, 0
      %p78 = por %p76, %p77
      %p79 = scmp.ne.s32.totalorder %s71, %s73
      %p80 = scmp.eq.s32.totalorder %s21, 1
      %p81 = por %p79, %p80
      %p82 = scmp.ne.s32.totalorder %s73, %s74
      %p83 = scmp.eq.s32.totalorder %s21, 0
      %p84 = por %p82, %p83
      %p85 = scmp.ne.s32.totalorder %s73, %s74
      %p86 = scmp.eq.s32.totalorder %s22, 1
      %p87 = por %p85, %p86
      %p89 = scmp.ne.s32.totalorder %s74, %s88
      %p90 = scmp.eq.s32.totalorder %s22, 0
      %p91 = por %p89, %p90
      %s93 = sadd.s32 %s92, 1
      %p96 = scmp.eq.s32.totalorder %s16, 1
      %p97 = scmp.ne.s32.totalorder %s92, %s94
      %p98 = scmp.eq.s32.totalorder %s16, 0
      %p99 = por %p97, %p98
      %p100 = scmp.ne.s32.totalorder %s92, %s94
      %p101 = scmp.eq.s32.totalorder %s21, 1
      %p102 = por %p100, %p101
      %p103 = scmp.ne.s32.totalorder %s94, %s95
      %p104 = scmp.eq.s32.totalorder %s21, 0
      %p105 = por %p103, %p104
      %p106 = scmp.ne.s32.totalorder %s94, %s95
      %p107 = scmp.eq.s32.totalorder %s22, 1
      %p108 = por %p106, %p107
      %p110 = scmp.ne.s32.totalorder %s95, %s109
      %p111 = scmp.eq.s32.totalorder %s22, 0
      %p112 = por %p110, %p111
      %s114 = sadd.s32 %s113, 1
      %p117 = scmp.eq.s32.totalorder %s16, 1
      %p118 = scmp.ne.s32.totalorder %s113, %s115
      %p119 = scmp.eq.s32.totalorder %s16, 0
      %p120 = por %p118, %p119
      %p121 = scmp.ne.s32.totalorder %s113, %s115
      %p122 = scmp.eq.s32.totalorder %s21, 1
      %p123 = por %p121, %p122
      %p124 = scmp.ne.s32.totalorder %s115, %s116
      %p125 = scmp.eq.s32.totalorder %s21, 0
      %p126 = por %p124, %p125
      %p127 = scmp.ne.s32.totalorder %s115, %s116
      %p128 = scmp.eq.s32.totalorder %s22, 1
      %p129 = por %p127, %p128
      %p131 = scmp.ne.s32.totalorder %s116, %s130
      %p132 = scmp.eq.s32.totalorder %s22, 0
      %p133 = por %p131, %p132
      %s135 = sadd.s32 %s134, 1
      %p138 = scmp.eq.s32.totalorder %s16, 1
      %p139 = scmp.ne.s32.totalorder %s134, %s136
      %p140 = scmp.eq.s32.totalorder %s16, 0
      %p141 = por %p139, %p140
      %p142 = scmp.ne.s32.totalorder %s134, %s136
      %p143 = scmp.eq.s32.totalorder %s21, 1
      %p144 = por %p142, %p143
      %p145 = scmp.ne.s32.totalorder %s136, %s137
      %p146 = scmp.eq.s32.totalorder %s21, 0
      %p147 = por %p145, %p146
      %p148 = scmp.ne.s32.totalorder %s136, %s137
      %p149 = scmp.eq.s32.totalorder %s22, 1
      %p150 = por %p148, %p149
      %p152 = scmp.ne.s32.totalorder %s137, %s151
      %p153 = scmp.eq.s32.totalorder %s22, 0
      %p154 = por %p152, %p153
      %s156 = sadd.s32 %s155, 1
      %p159 = scmp.eq.s32.totalorder %s16, 1
      %p160 = scmp.ne.s32.totalorder %s155, %s157
      %p161 = scmp.eq.s32.totalorder %s16, 0
      %p162 = por %p160, %p161
      %p163 = scmp.ne.s32.totalorder %s155, %s157
      %p164 = scmp.eq.s32.totalorder %s21, 1
      %p165 = por %p163, %p164
      %p166 = scmp.ne.s32.totalorder %s157, %s158
      %p167 = scmp.eq.s32.totalorder %s21, 0
      %p168 = por %p166, %p167
      %p169 = scmp.ne.s32.totalorder %s157, %s158
      %p170 = scmp.eq.s32.totalorder %s22, 1
      %p171 = por %p169, %p170
      %p173 = scmp.ne.s32.totalorder %s158, %s172
      %p174 = scmp.eq.s32.totalorder %s22, 0
      %p175 = por %p173, %p174
      %s176 = ssub.s32 %s16, %s23
      %p177 = scmp.eq.s32.totalorder %s176, 0
      %s179 = sadd.s32 %s178, 1
      %s180 = scalar_select %p177, %s178, %s179
      %p183 = pneg %p177
      %p184 = scmp.eq.s32.totalorder %s16, 1
      %p185 = por %p183, %p184
      %p186 = scmp.ne.s32.totalorder %s178, %s181
      %p187 = scmp.eq.s32.totalorder %s16, 0
      %p188 = por %p186, %p187
      %p189 = scmp.ne.s32.totalorder %s178, %s181
      %p190 = scmp.eq.s32.totalorder %s21, 1
      %p191 = por %p189, %p190
      %p192 = scmp.ne.s32.totalorder %s181, %s182
      %p193 = scmp.eq.s32.totalorder %s21, 0
      %p194 = por %p192, %p193
      %p195 = scmp.ne.s32.totalorder %s181, %s182
      %p196 = scmp.eq.s32.totalorder %s22, 1
      %p197 = por %p195, %p196
      %p199 = scmp.ne.s32.totalorder %s182, %s198
      %p200 = scmp.eq.s32.totalorder %s22, 0
      %p201 = por %p199, %p200
      %p202 = scmp.le.s32.totalorder 1, %s16
      %p203 = scmp.lt.s32.totalorder %s16, 3
      %p204 = pnand %p202, %p203
      %p205 = pneg %p204
      // Predicated region
      $region9: #{tpu_custom_call.1} parent=5 // pred_check
        _
      $region10: #{tpu_custom_call.1} parent=5 // pred_check_branch
        %207 = sbr.rel (%p204) target = $region12
      $region11: #{tpu_custom_call.1} parent=5 // pred_region
        %s208 = ssub.s32 %s16, 1
        // Predicated region
        $region13: #{tpu_custom_call.1} parent=11 // pred_check
          %p209 = pneg %p63
        $region14: #{tpu_custom_call.1} parent=11 // pred_check_branch
          %211 = sbr.rel (%p209) target = $region16
        $region15: #{tpu_custom_call.1} parent=11 // pred_region
          _
        $region16: #{tpu_custom_call.1} parent=11 // pred_fallthru
          _
        // Predicated region
        $region17: #{tpu_custom_call.1} parent=11 // pred_check
          %p212 = pneg %p84
        $region18: #{tpu_custom_call.1} parent=11 // pred_check_branch
          %214 = sbr.rel (%p212) target = $region20
        $region19: #{tpu_custom_call.1} parent=11 // pred_region
          _
        $region20: #{tpu_custom_call.1} parent=11 // pred_fallthru
          _
        // Predicated region
        $region21: #{tpu_custom_call.1} parent=11 // pred_check
          %p215 = pneg %p105
        $region22: #{tpu_custom_call.1} parent=11 // pred_check_branch
          %217 = sbr.rel (%p215) target = $region24
        $region23: #{tpu_custom_call.1} parent=11 // pred_region
          _
        $region24: #{tpu_custom_call.1} parent=11 // pred_fallthru
          _
        // Predicated region
        $region25: #{tpu_custom_call.1} parent=11 // pred_check
          %p218 = pneg %p126
        $region26: #{tpu_custom_call.1} parent=11 // pred_check_branch
          %220 = sbr.rel (%p218) target = $region28
        $region27: #{tpu_custom_call.1} parent=11 // pred_region
          _
        $region28: #{tpu_custom_call.1} parent=11 // pred_fallthru
          _
        // Predicated region
        $region29: #{tpu_custom_call.1} parent=11 // pred_check
          %p221 = pneg %p147
        $region30: #{tpu_custom_call.1} parent=11 // pred_check_branch
          %223 = sbr.rel (%p221) target = $region32
        $region31: #{tpu_custom_call.1} parent=11 // pred_region
          _
        $region32: #{tpu_custom_call.1} parent=11 // pred_fallthru
          _
        // Predicated region
        $region33: #{tpu_custom_call.1} parent=11 // pred_check
          %p224 = pneg %p168
        $region34: #{tpu_custom_call.1} parent=11 // pred_check_branch
          %226 = sbr.rel (%p224) target = $region36
        $region35: #{tpu_custom_call.1} parent=11 // pred_region
          _
        $region36: #{tpu_custom_call.1} parent=11 // pred_fallthru
          _
      $region12: #{tpu_custom_call.1} parent=5 // pred_fallthru
        _
      %p227 = scmp.lt.s32.totalorder %s16, 2
      // Predicated region
      $region37: #{tpu_custom_call.1} parent=5 // pred_check
        %p228 = pneg %p227
      $region38: #{tpu_custom_call.1} parent=5 // pred_check_branch
        %230 = sbr.rel (%p228) target = $region40
      $region39: #{tpu_custom_call.1} parent=5 // pred_region
        // Predicated region
        $region41: #{tpu_custom_call.1} parent=39 // pred_check
          %p231 = pneg %p36
        $region42: #{tpu_custom_call.1} parent=39 // pred_check_branch
          %233 = sbr.rel (%p231) target = $region44
        $region43: #{tpu_custom_call.1} parent=39 // pred_region
          %p234 = scmp.lt.s32.totalorder %s16, 1
          %s235 = scalar_select %p234, %s16, 1
          %s236 = smul.addr %s235, 4
          %s237 = scalar_lea.vmem %s0, %s236
        $region44: #{tpu_custom_call.1} parent=39 // pred_fallthru
          _
      $region40: #{tpu_custom_call.1} parent=5 // pred_fallthru
        _
      %p238 = scmp.le.s32.totalorder 1, %s16
      %p239 = scmp.lt.s32.totalorder %s16, 3
      %p240 = pnand %p238, %p239
      %p241 = pneg %p240
      // Predicated region
      $region45: #{tpu_custom_call.1} parent=5 // pred_check
        _
      $region46: #{tpu_custom_call.1} parent=5 // pred_check_branch
        %243 = sbr.rel (%p240) target = $region48
      $region47: #{tpu_custom_call.1} parent=5 // pred_region
        %s244 = ssub.s32 %s16, 1
        %p245 = scmp.lt.s32.totalorder %s21, 1
        %s246 = scalar_select %p245, %s21, 1
        %s247 = smul.addr %s246, 4
        %s248 = scalar_lea.vmem %s0, %s247
        %p249 = pneg %p42
        %p250 = pneg %p39
        %p251 = pneg %p63
        %p252 = pneg %p60
        %p253 = pneg %p84
        %p254 = pneg %p81
        %p255 = pneg %p105
        %p256 = pneg %p102
        %p257 = pneg %p126
        %p258 = pneg %p123
        %p259 = pneg %p147
        %p260 = pneg %p144
        %p261 = pneg %p168
        %p262 = pneg %p165
        %p263 = pneg %p194
        %p264 = pneg %p191
        %s265 = sand.u32 %s181, 1
        %s266 = scalar_lea.sflag [#allocation3], %s265
        %s267 = sand.u32 %s181, 1
        %s268 = smul.addr %s267, 4
        %s269 = scalar_lea.vmem [#allocation2], %s268
        %p270 = scmp.lt.s32.totalorder %s21, 1
        %s271 = scalar_select %p270, %s21, 1
        %s272 = smul.addr %s271, 4
        %s273 = scalar_lea.vmem %s0, %s272
        %v274 = vld [vmem:[%s1] sm:$0xff]
        %v275 = vld [vmem:[%s1 + $0x8] sm:$0xff]
        %v276 = vld [vmem:[%s2] sm:$0xff]
        %v277 = vld [vmem:[%s2 + $0x8] sm:$0xff]
        %v278 = vld [vmem:[%s3] sm:$0xff]
        %v279 = vld [vmem:[%s3 + $0x8] sm:$0xff]
        %v280 = vld [vmem:[%s4] sm:$0xff]
        %v281 = vld [vmem:[%s4 + $0x8] sm:$0xff]
        %v282 = vld [vmem:[%s5] sm:$0xf]
        %v283 = vld [vmem:[%s6] sm:$0xf]
        %v284 = vld [vmem:[%s273] sm:$0xf]
        %286 = vset.pattern.permute.xlu0 0
        %287 = vperm.xlu0 %286, %v276
        %v288 = vpop.permute.xlu0 %287
        %291 = vset.pattern.permute.xlu0 0
        %292 = vperm.xlu0 %291, %v277
        %v293 = vpop.permute.xlu0 %292
        %vm295 = vcmask 31744
        %v297 = vsel %vm295, %v274, 0
        %v300 = vsel %vm295, %v275, 0
        %vm302 = vcmask 1043456
        %v304 = vsel %vm302, %v284, 0
        %306 = vmatprep.subr.mxu0 0.0
        %307 = vmatpush1.msra.mxu0 %v304
        %308 = vmatprep.subr.mxu0 0.0
        %309 = vmatpush1.msra.mxu0 0.0
        %310 = vmatprep.subr.mxu0 0.0
        %311 = vmatpush1.msra.mxu0 0.0
        %312 = vmatprep.subr.mxu0 0.0
        %313 = vmatpush1.msra.mxu0 0.0
        %314 = vmatprep.subr.mxu0 0.0
        %315 = vmatpush1.msra.mxu0 0.0
        %316 = vmatprep.subr.mxu0 0.0
        %317 = vmatpush1.msra.mxu0 0.0
        %318 = vmatprep.subr.mxu0 0.0
        %319 = vmatpush1.msra.mxu0 0.0
        %320 = vmatprep.subr.mxu0 0.0
        %321 = vmatpush1.msra.mxu0 0.0
        %322 = vmatprep.subr.mxu0 0.0
        %323 = vmatpush1.msra.mxu0 0.0
        %324 = vmatprep.subr.mxu0 0.0
        %325 = vmatpush1.msra.mxu0 0.0
        %326 = vmatprep.subr.mxu0 0.0
        %327 = vmatpush1.msra.mxu0 0.0
        %328 = vmatprep.subr.mxu0 0.0
        %329 = vmatpush1.msra.mxu0 0.0
        %330 = vmatprep.subr.mxu0 0.0
        %331 = vmatpush1.msra.mxu0 0.0
        %332 = vmatprep.subr.mxu0 0.0
        %333 = vmatpush1.msra.mxu0 0.0
        %334 = vmatprep.subr.mxu0 0.0
        %335 = vmatpush1.msra.mxu0 0.0
        %336 = vmatprep.subr.mxu0 0.0
        %337 = vmatpush1.msra.mxu0 0.0
        %338 = vmatprep.subr.mxu0 0.0
        %339 = vmatpush1.msra.mxu0 0.0
        %340 = vmatprep.subr.mxu0 0.0
        %341 = vmatpush1.msra.mxu0 0.0
        %342 = vmatprep.subr.mxu0 0.0
        %343 = vmatpush1.msra.mxu0 0.0
        %344 = vmatprep.subr.mxu0 0.0
        %345 = vmatpush1.msra.mxu0 0.0
        %346 = vmatprep.subr.mxu0 0.0
        %347 = vmatpush1.msra.mxu0 0.0
        %348 = vmatprep.subr.mxu0 0.0
        %349 = vmatpush1.msra.mxu0 0.0
        %350 = vmatprep.subr.mxu0 0.0
        %351 = vmatpush1.msra.mxu0 0.0
        %352 = vmatprep.subr.mxu0 0.0
        %353 = vmatpush1.msra.mxu0 0.0
        %354 = vmatprep.subr.mxu0 0.0
        %355 = vmatpush1.msra.mxu0 0.0
        %356 = vmatprep.subr.mxu0 0.0
        %357 = vmatpush1.msra.mxu0 0.0
        %358 = vmatprep.subr.mxu0 0.0
        %359 = vmatpush1.msra.mxu0 0.0
        %360 = vmatprep.subr.mxu0 0.0
        %361 = vmatpush1.msra.mxu0 0.0
        %362 = vmatprep.subr.mxu0 0.0
        %363 = vmatpush1.msra.mxu0 0.0
        %364 = vmatprep.subr.mxu0 0.0
        %365 = vmatpush1.msra.mxu0 0.0
        %366 = vmatprep.subr.mxu0 0.0
        %367 = vmatpush1.msra.mxu0 0.0
        %368 = vmatprep.subr.mxu0 0.0
        %369 = vmatpush1.msra.mxu0 0.0
        %370 = vmatprep.mubr.f32.mxu0 0.0
        %371 = vmatmul.mubr.f32.gmra.mrb[0].mxu0 %v297
        %v372 = vpop.f32.mrb[0].mxu0
        %v373 = vadd.f32 %v288, %v372
        %v374 = vpop.f32.mrb[0].mxu0
        %375 = vmatprep.mubr.f32.mxu0 0.0
        %376 = vmatmul.mubr.f32.gmra.mrb[0].mxu0 %v300
        %v377 = vpop.f32.mrb[0].mxu0
        %v378 = vadd.f32 %v293, %v377
        %v379 = vpop.f32.mrb[0].mxu0
        %380 = vdwg.mxu0
        %v381 = vmax.f32 %v373, 0.0
        %v382 = vmax.f32 %v378, 0.0
        %385 = vrot.lane.b32.xlu0 %v381, 1
        %v386 = vpop.permute.xlu0 %385
        %387 = vrot.lane.b32.xlu0 %v382, 1
        %v388 = vpop.permute.xlu0 %387
        %vm391 = vcmask 7168
        %v392 = vsel %vm391, 0.0, %v386
        %v393 = vsel %vm391, 0.0, %v388
        %vm394 = vcmask 138240
        %v395 = vsel %vm394, %v392, 0.0
        %v396 = vsel %vm394, %v393, 0.0
        %398 = vset.pattern.permute.xlu0 0
        %399 = vperm.xlu0 %398, %v278
        %v400 = vpop.permute.xlu0 %399
        %403 = vset.pattern.permute.xlu0 0
        %404 = vperm.xlu0 %403, %v279
        %v405 = vpop.permute.xlu0 %404
        %v407 = vmul.f32 %v395, %v400
        %v408 = vmul.f32 %v396, %v405
        %409 = vset.pattern.permute.xlu0 1
        %410 = vperm.xlu0 %409, %v278
        %v411 = vpop.permute.xlu0 %410
        %413 = vset.pattern.permute.xlu0 1
        %414 = vperm.xlu0 %413, %v279
        %v415 = vpop.permute.xlu0 %414
        %v417 = vmul.f32 %v395, %v411
        %v418 = vmul.f32 %v396, %v415
        %421 = vrot.lane.b32.xlu0 %v417, 127
        %v422 = vpop.permute.xlu0 %421
        %423 = vrot.lane.b32.xlu0 %v418, 127
        %v424 = vpop.permute.xlu0 %423
        %v427 = vadd.f32 %v407, %v422
        %v428 = vadd.f32 %v408, %v424
        %429 = vset.pattern.permute.xlu0 2
        %430 = vperm.xlu0 %429, %v278
        %v431 = vpop.permute.xlu0 %430
        %433 = vset.pattern.permute.xlu0 2
        %434 = vperm.xlu0 %433, %v279
        %v435 = vpop.permute.xlu0 %434
        %v437 = vmul.f32 %v395, %v431
        %v438 = vmul.f32 %v396, %v435
        %441 = vrot.lane.b32.xlu0 %v437, 126
        %v442 = vpop.permute.xlu0 %441
        %443 = vrot.lane.b32.xlu0 %v438, 126
        %v444 = vpop.permute.xlu0 %443
        %v447 = vadd.f32 %v427, %v442
        %v448 = vadd.f32 %v428, %v444
        %450 = vset.pattern.permute.xlu0 0
        %451 = vperm.xlu0 %450, %v280
        %v452 = vpop.permute.xlu0 %451
        %455 = vset.pattern.permute.xlu0 0
        %456 = vperm.xlu0 %455, %v281
        %v457 = vpop.permute.xlu0 %456
        %v459 = vadd.f32 %v447, %v452
        %v460 = vadd.f32 %v448, %v457
        %v461 = vmax.f32 %v459, 0.0
        %v462 = vmax.f32 %v460, 0.0
        %464 = vset.pattern.permute.xlu0 0
        %465 = vperm.xlu0 %464, %v283
        %v466 = vpop.permute.xlu0 %465
        %vm468 = vcmask 130048
        %v470 = vsel %vm468, %v282, 0
        %472 = vmatprep.subr.mxu0 0.0
        %473 = vmatpush1.msra.mxu0 %v461
        %474 = vmatprep.subr.mxu0 0.0
        %475 = vmatpush1.msra.mxu0 %v462
        %476 = vmatprep.subr.mxu0 0.0
        %477 = vmatpush1.msra.mxu0 0.0
        %478 = vmatprep.subr.mxu0 0.0
        %479 = vmatpush1.msra.mxu0 0.0
        %480 = vmatprep.subr.mxu0 0.0
        %481 = vmatpush1.msra.mxu0 0.0
        %482 = vmatprep.subr.mxu0 0.0
        %483 = vmatpush1.msra.mxu0 0.0
        %484 = vmatprep.subr.mxu0 0.0
        %485 = vmatpush1.msra.mxu0 0.0
        %486 = vmatprep.subr.mxu0 0.0
        %487 = vmatpush1.msra.mxu0 0.0
        %488 = vmatprep.subr.mxu0 0.0
        %489 = vmatpush1.msra.mxu0 0.0
        %490 = vmatprep.subr.mxu0 0.0
        %491 = vmatpush1.msra.mxu0 0.0
        %492 = vmatprep.subr.mxu0 0.0
        %493 = vmatpush1.msra.mxu0 0.0
        %494 = vmatprep.subr.mxu0 0.0
        %495 = vmatpush1.msra.mxu0 0.0
        %496 = vmatprep.subr.mxu0 0.0
        %497 = vmatpush1.msra.mxu0 0.0
        %498 = vmatprep.subr.mxu0 0.0
        %499 = vmatpush1.msra.mxu0 0.0
        %500 = vmatprep.subr.mxu0 0.0
        %501 = vmatpush1.msra.mxu0 0.0
        %502 = vmatprep.subr.mxu0 0.0
        %503 = vmatpush1.msra.mxu0 0.0
        %504 = vmatprep.subr.mxu0 0.0
        %505 = vmatpush1.msra.mxu0 0.0
        %506 = vmatprep.subr.mxu0 0.0
        %507 = vmatpush1.msra.mxu0 0.0
        %508 = vmatprep.subr.mxu0 0.0
        %509 = vmatpush1.msra.mxu0 0.0
        %510 = vmatprep.subr.mxu0 0.0
        %511 = vmatpush1.msra.mxu0 0.0
        %512 = vmatprep.subr.mxu0 0.0
        %513 = vmatpush1.msra.mxu0 0.0
        %514 = vmatprep.subr.mxu0 0.0
        %515 = vmatpush1.msra.mxu0 0.0
        %516 = vmatprep.subr.mxu0 0.0
        %517 = vmatpush1.msra.mxu0 0.0
        %518 = vmatprep.subr.mxu0 0.0
        %519 = vmatpush1.msra.mxu0 0.0
        %520 = vmatprep.subr.mxu0 0.0
        %521 = vmatpush1.msra.mxu0 0.0
        %522 = vmatprep.subr.mxu0 0.0
        %523 = vmatpush1.msra.mxu0 0.0
        %524 = vmatprep.subr.mxu0 0.0
        %525 = vmatpush1.msra.mxu0 0.0
        %526 = vmatprep.subr.mxu0 0.0
        %527 = vmatpush1.msra.mxu0 0.0
        %528 = vmatprep.subr.mxu0 0.0
        %529 = vmatpush1.msra.mxu0 0.0
        %530 = vmatprep.subr.mxu0 0.0
        %531 = vmatpush1.msra.mxu0 0.0
        %532 = vmatprep.subr.mxu0 0.0
        %533 = vmatpush1.msra.mxu0 0.0
        %534 = vmatprep.subr.mxu0 0.0
        %535 = vmatpush1.msra.mxu0 0.0
        %536 = vmatprep.mubr.f32.mxu0 0.0
        %537 = vmatmul.mubr.f32.gmra.mrb[0].mxu0 %v470
        %v538 = vpop.f32.mrb[0].mxu0
        %v539 = vadd.f32 %v466, %v538
        %v540 = vpop.f32.mrb[0].mxu0
        %541 = vdwg.mxu0
        %v542 = vadd.f32 %v539, %v284
        %vm543 = vcmask 125952
        %544 = vst.msk [vmem:[%s269] sm:$0xf] %vm543, %v542
        %s545 = sand.u32 %s181, 1
        %s546 = scalar_lea.sflag [#allocation3], %s545
        %s547 = sand.u32 %s181, 1
        %s548 = smul.addr %s547, 4
        %s549 = scalar_lea.vmem [#allocation2], %s548
        // Predicated region
        $region49: #{tpu_custom_call.1} parent=47 // pred_check
          %p550 = pneg %p191
        $region50: #{tpu_custom_call.1} parent=47 // pred_check_branch
          %552 = sbr.rel (%p550) target = $region52
        $region51: #{tpu_custom_call.1} parent=47 // pred_region
          %s554 = ssub.s32 64, 64
          %555 = vsyncadd %s546, %s554
          %s556 = smul.addr %s21, 64
          %s557 = scalar_lea.hbm %s7, %s556
          %s559 = sshll.u32 %s549, 4
          %s560 = int_to_ptr.vmem [resolvable:$true] %s559
          %562 = dma.vmem_to_hbm [thread:$0]  %s560, 64, %s557, %s546
        $region52: #{tpu_custom_call.1} parent=47 // pred_fallthru
          _
      $region48: #{tpu_custom_call.1} parent=5 // pred_fallthru
        _
      %p563 = scmp.le.s32.totalorder 2, %s16
      // Predicated region
      $region53: #{tpu_custom_call.1} parent=5 // pred_check
        %p564 = pneg %p563
      $region54: #{tpu_custom_call.1} parent=5 // pred_check_branch
        %566 = sbr.rel (%p564) target = $region56
      $region55: #{tpu_custom_call.1} parent=5 // pred_region
        %s567 = ssub.s32 %s16, 2
        // Predicated region
        $region57: #{tpu_custom_call.1} parent=55 // pred_check
          %p568 = pneg %p197
        $region58: #{tpu_custom_call.1} parent=55 // pred_check_branch
          %570 = sbr.rel (%p568) target = $region60
        $region59: #{tpu_custom_call.1} parent=55 // pred_region
          %s571 = sand.u32 %s182, 1
          %s572 = scalar_lea.sflag [#allocation3], %s571
          %s573 = sand.u32 %s182, 1
          %s574 = smul.addr %s573, 4
          %s575 = scalar_lea.vmem [#allocation2], %s574
          %576 = dma.done %s572, 64
        $region60: #{tpu_custom_call.1} parent=55 // pred_fallthru
          _
      $region56: #{tpu_custom_call.1} parent=5 // pred_fallthru
        _
    $region6: #{tpu_custom_call.1} parent=1 // loop_footer
      %s20 = sadd.s32 1, %s16
    $region7: #{tpu_custom_call.1} parent=1 // loop_footer_branch
      %15 = sbr.rel target = $region3
    $region8: #{tpu_custom_call.1} parent=1 // loop_exit
      _
    %577 = vsyncpa [#allocation3], 1
    %s578 = scalar_lea.sflag [#allocation3], 1
    %579 = vsyncpa %s578, 1

</llo_original>
